<compile_context>
chip_gen: v6e
topology: v6e:2x2x1
jax: 0.10.0
libtpu: 0.0.40
codegen_flags: <defaults>
</compile_context>

<pallas_src>
import jax
import jax.numpy as jnp
from jax import lax
from jax.experimental import pallas as pl
from jax.experimental.pallas import tpu as pltpu


def _round_up(x, m):
    return (x + m - 1) // m * m


# ---------------------------------------------------------------------------
# Path A: small vocab -- table resident in VMEM, one-hot gather on the MXU.
# ---------------------------------------------------------------------------
def _embedding_onehot_kernel(ids_ref, table_ref, out_ref):
    """One token tile of embedding gather via one-hot matmul.

    ids_ref:   VMEM int32  [token_tile, 1]     token ids for this tile
    table_ref: VMEM float  [V_pad, D_pad]      whole table, resident across tiles
    out_ref:   VMEM float  [token_tile, D_pad] output tile
    """
    tt = out_ref.shape[0]
    v_pad = table_ref.shape[0]
    ids = ids_ref[...]                                         # (tt, 1)
    cols = lax.broadcasted_iota(jnp.int32, (tt, v_pad), 1)     # (tt, V_pad)
    onehot = (ids == cols).astype(table_ref.dtype)             # lane-dense one-hot
    out_ref[...] = jnp.dot(
        onehot, table_ref[...], preferred_element_type=jnp.float32
    ).astype(out_ref.dtype)


# ---------------------------------------------------------------------------
# Path B: large vocab fallback -- table stays in HBM, per-row gather DMAs.
# ---------------------------------------------------------------------------
def _embedding_rowdma_kernel(ids_hbm, table_hbm, out_ref, ids_smem, ids_sem, row_sem):
    """Gather `token_tile` table rows HBM -> output VMEM block via row DMAs.

    ids_hbm:   HBM  int32 [T_pad]              all token ids (never copied whole)
    table_hbm: HBM  float [V_pad, D_pad]       embedding table (stays in HBM)
    out_ref:   VMEM float [token_tile, D_pad]  output tile (pipeline writes back)
    ids_smem:  SMEM int32 [token_tile]         this tile's ids (bounded SMEM use)
    ids_sem / row_sem: DMA semaphores
    """
    tt = out_ref.shape[0]
    base = pl.multiple_of(pl.program_id(0) * tt, tt)

    # Fetch this tile's ids into SMEM (scales to arbitrary sequence lengths,
    # unlike whole-array scalar prefetch).  Scalar id reads happen only after
    # this single wait, so no sst->sld forwarding is broken inside the loops.
    ids_cp = pltpu.make_async_copy(ids_hbm.at[pl.ds(base, tt)], ids_smem, ids_sem)
    ids_cp.start()
    ids_cp.wait()

    # Phase 1: issue all row DMAs (they overlap on the DMA engine).  Unrolled
    # so the SMEM id load of iteration t+1 co-issues with t's descriptor push.
    def _start(t, carry):
        tok = ids_smem[t]
        pltpu.make_async_copy(
            table_hbm.at[pl.ds(tok, 1), :],
            out_ref.at[pl.ds(t, 1), :],
            row_sem,
        ).start()
        return carry

    lax.fori_loop(0, tt, _start, 0, unroll=8)

    # Phase 2: wait for all of them.  Every copy is an identical (1, D_pad)
    # transfer, so N same-sized waits on the shared counting semaphore drain
    # exactly the N completions.
    def _wait(t, carry):
        pltpu.make_async_copy(
            table_hbm.at[pl.ds(0, 1), :],      # src index irrelevant for wait
            out_ref.at[pl.ds(t, 1), :],
            row_sem,
        ).wait()
        return carry

    lax.fori_loop(0, tt, _wait, 0, unroll=8)


# ---------------------------------------------------------------------------
# Wrapper / dispatch.
# ---------------------------------------------------------------------------
def embedding_packed_data(
    indices,
    table,
    output_dim=None,
    *,
    token_tile=256,
    onehot_max_vocab=2048,          # crossover ~2048 on v6e/v7x; use ~512 on v5e
    vmem_table_budget_bytes=12 << 20,  # conservative resident-table cap (v7x: 64 MiB VMEM)
    force_hbm_gather=False,
):
    """Embedding lookup on the flat packed-sequence data tensor.

    indices: int   [T_total]                   token ids
    table:   float [V, D]                      embedding table (ideally already
                                               lane-padded at creation time)
    returns: float [T_total, output_dim]
    """
    T = int(indices.shape[0])
    V, D_in = table.shape
    if output_dim is None:
        output_dim = D_in
    itemsize = table.dtype.itemsize

    # Lane-pad the embedding dim so every table row / output block is
    # lane-dense (>= 512 B rows, unmasked vector-store writeback).  This is a
    # no-op if the caller already padded the table at creation time.
    D_pad = _round_up(max(D_in, 128), 128)

    # Decide the gather path from the size of the table that would be resident.
    v_pad_onehot = _round_up(max(V, 128), 128)
    resident_bytes = v_pad_onehot * D_pad * itemsize
    use_onehot = (
        (not force_hbm_gather)
        and v_pad_onehot <= onehot_max_vocab
        and resident_bytes <= vmem_table_budget_bytes
    )
    V_pad = v_pad_onehot if use_onehot else _round_up(max(V, 8), 8)
    table_bytes = V_pad * D_pad * itemsize

    if (V_pad, D_pad) != (V, D_in):
        # Only reached if the caller did not pre-pad the table.
        table = jnp.pad(table, ((0, V_pad - V), (0, D_pad - D_in)))

    # torch.nn.Embedding raises on out-of-range ids; clamp so the gather can
    # never read outside the (padded) table.
    ids = jnp.clip(indices.astype(jnp.int32), 0, V - 1)

    # Shrink the tile for short sequences; pad T only when actually required.
    token_tile = max(8, min(token_tile, _round_up(T, 8)))
    num_tiles = pl.cdiv(T, token_tile)
    t_pad = num_tiles * token_tile
    if t_pad != T:
        ids = jnp.pad(ids, (0, t_pad - T))   # id 0 is a valid row; sliced off below

    out_block_bytes = token_tile * D_pad * itemsize

    if use_onehot:
        cost = pl.CostEstimate(
            flops=2 * t_pad * V_pad * D_pad,
            transcendentals=0,
            bytes_accessed=int(t_pad * 4 + table_bytes + t_pad * D_pad * itemsize),
        )
        vmem_needed = 2 * table_bytes + 4 * out_block_bytes + 8 * token_tile * 4 + (2 << 20)
        vmem_limit = int(min(max(vmem_needed, 16 << 20), 32 << 20))
        out = pl.pallas_call(
            _embedding_onehot_kernel,
            out_shape=jax.ShapeDtypeStruct((t_pad, D_pad), table.dtype),
            grid=(num_tiles,),
            in_specs=[
                pl.BlockSpec((token_tile, 1), lambda i: (i, 0)),   # per-tile ids
                pl.BlockSpec((V_pad, D_pad), lambda i: (0, 0)),    # resident table
            ],
            out_specs=pl.BlockSpec((token_tile, D_pad), lambda i: (i, 0)),
            compiler_params=pltpu.CompilerParams(
                dimension_semantics=("parallel",),
                vmem_limit_bytes=vmem_limit,
            ),
            cost_estimate=cost,
        )(ids.reshape(t_pad, 1), table)
    else:
        cost = pl.CostEstimate(
            flops=0,
            transcendentals=0,
            bytes_accessed=int(t_pad * 4 + 2 * t_pad * D_pad * itemsize),
        )
        vmem_limit = int(min(max(4 * out_block_bytes + (2 << 20), 16 << 20), 32 << 20))
        out = pl.pallas_call(
            _embedding_rowdma_kernel,
            out_shape=jax.ShapeDtypeStruct((t_pad, D_pad), table.dtype),
            grid=(num_tiles,),
            in_specs=[
                pl.BlockSpec(memory_space=pl.ANY),   # ids stay in HBM
                pl.BlockSpec(memory_space=pl.ANY),   # table stays in HBM
            ],
            out_specs=pl.BlockSpec((token_tile, D_pad), lambda i: (i, 0)),
            scratch_shapes=[
                pltpu.SMEM((token_tile,), jnp.int32),
                pltpu.SemaphoreType.DMA(()),
                pltpu.SemaphoreType.DMA(()),
            ],
            compiler_params=pltpu.CompilerParams(
                dimension_semantics=("parallel",),
                vmem_limit_bytes=vmem_limit,
            ),
            cost_estimate=cost,
        )(ids, table)

    if t_pad != T or D_pad != output_dim:
        out = out[:T, :output_dim]
    return out


class EmbbedingForPackedSequenceLayerPallas:
    """JAX/Pallas port: embedding applied element-wise to PackedSequence.data."""

    def __init__(self, input_dim, output_dim, key):
        self.input_dim = input_dim
        self.output_dim = output_dim
        # nn.Embedding default init ~ N(0, 1); deterministic synthetic weights.
        self.weight = jax.random.normal(
            key, (input_dim, output_dim), dtype=jnp.float32
        )
        # Lane-pad the table ONCE at creation time (rows -> 128-lane multiple,
        # vocab -> 128 multiple) so the per-call kernel never re-pads it.
        v_pad = _round_up(max(input_dim, 128), 128)
        d_pad = _round_up(max(output_dim, 128), 128)
        self.table_padded = jnp.pad(
            self.weight, ((0, v_pad - input_dim), (0, d_pad - output_dim))
        )

    def __call__(self, packed_sequence, *, force_hbm_gather=False):
        # packed_sequence is a dict mimicking torch PackedSequence fields.
        data = packed_sequence["data"]                  # [T_total] int ids
        emb = embedding_packed_data(
            data,
            self.table_padded,
            self.output_dim,
            force_hbm_gather=force_hbm_gather,
        )                                               # [T_total, output_dim]
        return {
            "data": emb,
            "batch_sizes": packed_sequence["batch_sizes"],
            "sorted_indices": packed_sequence["sorted_indices"],
            "unsorted_indices": packed_sequence["unsorted_indices"],
        }


if __name__ == "__main__":
    key = jax.random.PRNGKey(0)
    k_w, k_idx = jax.random.split(key)

    input_dim = 16    # vocab size
    output_dim = 32   # embedding dim
    # A packed sequence for batch=4 with lengths [8, 7, 6, 3] -> T_total = 24.
    lengths = [8, 7, 6, 3]
    T_total = sum(lengths)
    max_len = max(lengths)
    batch_sizes = jnp.array(
        [sum(1 for L in lengths if L > t) for t in range(max_len)], dtype=jnp.int32
    )

    layer = EmbbedingForPackedSequenceLayerPallas(input_dim, output_dim, k_w)

    packed = {
        "data": jax.random.randint(k_idx, (T_total,), 0, input_dim, dtype=jnp.int32),
        "batch_sizes": batch_sizes,
        "sorted_indices": jnp.arange(len(lengths), dtype=jnp.int32),
        "unsorted_indices": jnp.arange(len(lengths), dtype=jnp.int32),
    }

    # Plain-JAX reference gather on the packed data.
    ref = jnp.take(layer.weight, packed["data"], axis=0)

    # Path A: VMEM-resident table + one-hot MXU gather (default for this vocab).
    out = layer(packed)
    jax.block_until_ready(out["data"])
    assert out["data"].shape == (T_total, output_dim)
    assert jnp.allclose(out["data"], ref), "one-hot path mismatch vs reference"
    assert out["batch_sizes"] is packed["batch_sizes"]
    assert out["sorted_indices"] is packed["sorted_indices"]
    assert out["unsorted_indices"] is packed["unsorted_indices"]

    # Path B: HBM row-DMA gather fallback (large-vocab path), forced so it is
    # compiled and exercised too.
    out_hbm = layer(packed, force_hbm_gather=True)
    jax.block_until_ready(out_hbm["data"])
    assert out_hbm["data"].shape == (T_total, output_dim)
    assert jnp.allclose(out_hbm["data"], ref), "row-DMA path mismatch vs reference"

    print("KERNEL_OK")
</pallas_src>

<mosaic_0001>
module attributes {stable_mosaic.version = 11 : i64} {
  func.func @_embedding_onehot_kernel(%arg0: i32, %arg1: memref<24x1xi32, #tpu.memory_space<vmem>>, %arg2: memref<128x128xf32, #tpu.memory_space<vmem>>, %arg3: memref<24x128xf32, #tpu.memory_space<vmem>>) attributes {dimension_semantics = [#tpu.dimension_semantics<parallel>], iteration_bounds = array<i64: 1>, scalar_prefetch = 0 : i64, scratch_operands = 0 : i64, tpu.core_type = #tpu.core_type<tc>, window_params = [{transform_indices = @transform_0, window_bounds = array<i64: 24, 1>}, {pipeline_mode = #tpu.pipeline_mode<synchronous>, transform_indices = @transform_1, window_bounds = array<i64: 128, 128>}, {transform_indices = @transform_2, window_bounds = array<i64: 24, 128>}]} {
    %c0 = arith.constant 0 : index
    %c0_0 = arith.constant 0 : index
    %0 = vector.load %arg1[%c0, %c0_0] : memref<24x1xi32, #tpu.memory_space<vmem>>, vector<24x1xi32>
    %1 = tpu.iota {dimensions = array<i32: 1>} : vector<24x128xi32>
    %2 = vector.broadcast %0 : vector<24x1xi32> to vector<24x128xi32>
    %3 = arith.cmpi eq, %2, %1 : vector<24x128xi32>
    %4 = arith.extui %3 : vector<24x128xi1> to vector<24x128xi32>
    %5 = arith.sitofp %4 : vector<24x128xi32> to vector<24x128xf32>
    %c0_1 = arith.constant 0 : index
    %c0_2 = arith.constant 0 : index
    %6 = vector.load %arg2[%c0_1, %c0_2] : memref<128x128xf32, #tpu.memory_space<vmem>>, vector<128x128xf32>
    %cst = arith.constant dense<0.000000e+00> : vector<24x128xf32>
    %7 = tpu.matmul %5, %6, %cst {dimension_numbers = #tpu.dot_dimension_numbers<[1], [0], [0], [1], [0, 0, 1, 1], [], []>} : vector<24x128xf32>, vector<128x128xf32>, vector<24x128xf32> -> vector<24x128xf32>
    %c0_3 = arith.constant 0 : index
    %c0_4 = arith.constant 0 : index
    %8 = vector.load %arg3[%c0_3, %c0_4] : memref<24x128xf32, #tpu.memory_space<vmem>>, vector<24x128xf32>
    tpu.vector_store %arg3[%c0_3, %c0_4], %7 {strides = array<i32>} : memref<24x128xf32, #tpu.memory_space<vmem>>, vector<24x128xf32>,
    return
  }
  func.func @transform_0(%arg0: i32) -> (i32, i32) {
    %c0_i32 = arith.constant 0 : i32
    %c0_i32_0 = arith.constant 0 : i32
    return %arg0, %c0_i32 : i32, i32
  }
  func.func @transform_1(%arg0: i32) -> (i32, i32) {
    %c0_i32 = arith.constant 0 : i32
    %c0_i32_0 = arith.constant 0 : i32
    %c0_i32_1 = arith.constant 0 : i32
    return %c0_i32, %c0_i32_0 : i32, i32
  }
  func.func @transform_2(%arg0: i32) -> (i32, i32) {
    %c0_i32 = arith.constant 0 : i32
    %c0_i32_0 = arith.constant 0 : i32
    return %arg0, %c0_i32 : i32, i32
  }
}

</mosaic_0001>

<llo_original>
// kernel: tpu_custom_call.1
$region0: #{tpu_custom_call.1}
  #allocation0 [shape = 'u32[]', space=smem, size = 0x4, offset = 0x4, fixed_abs, tag = 'smem constant byte address 0x4 - core index']
  #allocation1 [shape = 'u32[144,128]{1,0:T(1,128)}', space=vmem, size = 0x12000, scoped, tag = 'internal scratch']
  %s0 = inlined_call_operand.vmem [shape: s32[24,1], index: 0, kind: input, shape index: {}]
  %s1 = inlined_call_operand.hbm [shape: f32[128,128], index: 1, kind: input, shape index: {}]
  %s2 = inlined_call_operand.hbm [shape: f32[24,128], index: 2, kind: output, shape index: {}]
  %s3 = sld [smem:[#allocation0]]
  $region22: #{tpu_custom_call.1} parent=0
    _
  %s5 = ssub.s32 1, %s3
  %s6 = scalar_select 0, %s5, %s3
  $region1: #{tpu_custom_call.1} parent=0
    #allocation2 [shape = 'u8[65536]{0}', space=vmem, size = 0x10000, scoped, tag = 'input window, operand 1, single buffered']
    #allocation3 [shape = 's32[1]{0}', space=sflag, size = 0x4, scoped, tag = 'scoped memory for tpu_custom_call.1']
    #allocation4 [shape = 's32[1]{0}', space=sflag, size = 0x4, scoped, tag = 'scoped memory for tpu_custom_call.1']
    #allocation5 [shape = 'u8[12288]{0}', space=vmem, size = 0x3000, scoped, tag = 'output window, operand 0, single buffered']
    %7 = vsyncpa [#allocation3], 0
    %8 = vsyncpa [#allocation4], 0
    // Predicated region
    $region2: #{tpu_custom_call.1} parent=1 // pred_check
      _
    $region3: #{tpu_custom_call.1} parent=1 // pred_check_branch
      %10 = sbr.rel (0) target = $region5
    $region4: #{tpu_custom_call.1} parent=1 // pred_region
      _
    $region5: #{tpu_custom_call.1} parent=1 // pred_fallthru
      _
    // Predicated region
    $region6: #{tpu_custom_call.1} parent=1 // pred_check
      _
    $region7: #{tpu_custom_call.1} parent=1 // pred_check_branch
      %12 = sbr.rel (0) target = $region9
    $region8: #{tpu_custom_call.1} parent=1 // pred_region
      %s14 = ssub.s32 2048, 2048
      %15 = vsyncadd [#allocation3], %s14
      %s16 = sshll.u32 [#allocation2], 4
      %s17 = int_to_ptr.vmem [resolvable:$true] %s16
      %22 = dma.hbm_to_vmem [thread:$0]  %s1, 2048, %s17, [#allocation3], 128, 128, 8
    $region9: #{tpu_custom_call.1} parent=1 // pred_fallthru
      _
    // Predicated region
    $region10: #{tpu_custom_call.1} parent=1 // pred_check
      _
    $region11: #{tpu_custom_call.1} parent=1 // pred_check_branch
      %24 = sbr.rel (0) target = $region13
    $region12: #{tpu_custom_call.1} parent=1 // pred_region
      %25 = dma.done [#allocation3], 2048
    $region13: #{tpu_custom_call.1} parent=1 // pred_fallthru
      _
    %v26 = vld [vmem:[%s0] sm:$0xff]
    %v27 = vld [vmem:[%s0 + $0x8] sm:$0xff]
    %v28 = vld [vmem:[%s0 + $0x10] sm:$0xff]
    %v29 = vlaneseq
    %v30 = vand.u32 %v29, 127
    %31 = vset.pattern.permute.xlu0 0
    %32 = vperm.xlu0 %31, %v26
    %v33 = vpop.permute.xlu0 %32
    %34 = vset.pattern.permute.xlu0 0
    %35 = vperm.xlu0 %34, %v27
    %v36 = vpop.permute.xlu0 %35
    %37 = vset.pattern.permute.xlu0 0
    %38 = vperm.xlu0 %37, %v28
    %v39 = vpop.permute.xlu0 %38
    %vm40 = vcmp.eq.s32.totalorder %v33, %v30
    %vm41 = vcmp.eq.s32.totalorder %v36, %v30
    %vm42 = vcmp.eq.s32.totalorder %v39, %v30
    %v43 = vsel %vm40, 1, 0
    %v44 = vsel %vm41, 1, 0
    %v45 = vsel %vm42, 1, 0
    %v46 = vcvt.s32.f32 %v43
    %v47 = vcvt.s32.f32 %v44
    %v48 = vcvt.s32.f32 %v45
    %v49 = vld [vmem:[#allocation2] sm:$0xff]
    %v50 = vld [vmem:[#allocation2 + $0x8] sm:$0xff]
    %v51 = vld [vmem:[#allocation2 + $0x10] sm:$0xff]
    %v52 = vld [vmem:[#allocation2 + $0x18] sm:$0xff]
    %v53 = vld [vmem:[#allocation2 + $0x20] sm:$0xff]
    %v54 = vld [vmem:[#allocation2 + $0x28] sm:$0xff]
    %v55 = vld [vmem:[#allocation2 + $0x30] sm:$0xff]
    %v56 = vld [vmem:[#allocation2 + $0x38] sm:$0xff]
    %v57 = vld [vmem:[#allocation2 + $0x40] sm:$0xff]
    %v58 = vld [vmem:[#allocation2 + $0x48] sm:$0xff]
    %v59 = vld [vmem:[#allocation2 + $0x50] sm:$0xff]
    %v60 = vld [vmem:[#allocation2 + $0x58] sm:$0xff]
    %v61 = vld [vmem:[#allocation2 + $0x60] sm:$0xff]
    %v62 = vld [vmem:[#allocation2 + $0x68] sm:$0xff]
    %v63 = vld [vmem:[#allocation2 + $0x70] sm:$0xff]
    %v64 = vld [vmem:[#allocation2 + $0x78] sm:$0xff]
    %65 = vmatprep.subr.mxu0 0.0
    %66 = vmatpush1.msra.mxu0 %v64
    %67 = vmatprep.subr.mxu0 0.0
    %68 = vmatpush1.msra.mxu0 %v63
    %69 = vmatprep.subr.mxu0 0.0
    %70 = vmatpush1.msra.mxu0 %v62
    %71 = vmatprep.subr.mxu0 0.0
    %72 = vmatpush1.msra.mxu0 %v61
    %73 = vmatprep.subr.mxu0 0.0
    %74 = vmatpush1.msra.mxu0 %v60
    %75 = vmatprep.subr.mxu0 0.0
    %76 = vmatpush1.msra.mxu0 %v59
    %77 = vmatprep.subr.mxu0 0.0
    %78 = vmatpush1.msra.mxu0 %v58
    %79 = vmatprep.subr.mxu0 0.0
    %80 = vmatpush1.msra.mxu0 %v57
    %81 = vmatprep.subr.mxu0 0.0
    %82 = vmatpush1.msra.mxu0 %v56
    %83 = vmatprep.subr.mxu0 0.0
    %84 = vmatpush1.msra.mxu0 %v55
    %85 = vmatprep.subr.mxu0 0.0
    %86 = vmatpush1.msra.mxu0 %v54
    %87 = vmatprep.subr.mxu0 0.0
    %88 = vmatpush1.msra.mxu0 %v53
    %89 = vmatprep.subr.mxu0 0.0
    %90 = vmatpush1.msra.mxu0 %v52
    %91 = vmatprep.subr.mxu0 0.0
    %92 = vmatpush1.msra.mxu0 %v51
    %93 = vmatprep.subr.mxu0 0.0
    %94 = vmatpush1.msra.mxu0 %v50
    %95 = vmatprep.subr.mxu0 0.0
    %96 = vmatpush1.msra.mxu0 %v49
    %97 = vmatprep.subr.mxu0 0.0
    %98 = vmatpush2.msra.mxu0 0.0
    %99 = vmatprep.subr.mxu0 0.0
    %100 = vmatpush2.msra.mxu0 0.0
    %101 = vmatprep.subr.mxu0 0.0
    %102 = vmatpush2.msra.mxu0 0.0
    %103 = vmatprep.subr.mxu0 0.0
    %104 = vmatpush2.msra.mxu0 0.0
    %105 = vmatprep.subr.mxu0 0.0
    %106 = vmatpush2.msra.mxu0 0.0
    %107 = vmatprep.subr.mxu0 0.0
    %108 = vmatpush2.msra.mxu0 0.0
    %109 = vmatprep.subr.mxu0 0.0
    %110 = vmatpush2.msra.mxu0 0.0
    %111 = vmatprep.subr.mxu0 0.0
    %112 = vmatpush2.msra.mxu0 0.0
    %113 = vmatprep.subr.mxu0 0.0
    %114 = vmatpush2.msra.mxu0 0.0
    %115 = vmatprep.subr.mxu0 0.0
    %116 = vmatpush2.msra.mxu0 0.0
    %117 = vmatprep.subr.mxu0 0.0
    %118 = vmatpush2.msra.mxu0 0.0
    %119 = vmatprep.subr.mxu0 0.0
    %120 = vmatpush2.msra.mxu0 0.0
    %121 = vmatprep.subr.mxu0 0.0
    %122 = vmatpush2.msra.mxu0 0.0
    %123 = vmatprep.subr.mxu0 0.0
    %124 = vmatpush2.msra.mxu0 0.0
    %125 = vmatprep.subr.mxu0 0.0
    %126 = vmatpush2.msra.mxu0 0.0
    %127 = vmatprep.subr.mxu0 0.0
    %128 = vmatpush2.msra.mxu0 0.0
    %129 = vmatprep.mubr.f32.mxu0 0.0
    %130 = vmatmul.mubr.f32.gmra.mxu0 %v46
    %v131 = vpop.f32.mrf.mxu0
    %v132 = vadd.f32 0.0, %v131
    %v133 = vpop.f32.mrf.mxu0
    %134 = vmatprep.mubr.f32.mxu0 0.0
    %135 = vmatmul.mubr.f32.gmra.mxu0 %v47
    %v136 = vpop.f32.mrf.mxu0
    %v137 = vadd.f32 0.0, %v136
    %v138 = vpop.f32.mrf.mxu0
    %139 = vmatprep.mubr.f32.mxu0 0.0
    %140 = vmatmul.mubr.f32.gmra.mxu0 %v48
    %v141 = vpop.f32.mrf.mxu0
    %v142 = vadd.f32 0.0, %v141
    %v143 = vpop.f32.mrf.mxu0
    %144 = vdwg.mxu0
    %145 = vst [vmem:[#allocation5] sm:$0xff] %v132
    %146 = vst [vmem:[#allocation5 + $0x8] sm:$0xff] %v137
    %147 = vst [vmem:[#allocation5 + $0x10] sm:$0xff] %v142
    // Predicated region
    $region14: #{tpu_custom_call.1} parent=1 // pred_check
      _
    $region15: #{tpu_custom_call.1} parent=1 // pred_check_branch
      %149 = sbr.rel (0) target = $region17
    $region16: #{tpu_custom_call.1} parent=1 // pred_region
      %s151 = ssub.s32 384, 384
      %152 = vsyncadd [#allocation4], %s151
      %s153 = sshll.u32 [#allocation5], 4
      %s154 = int_to_ptr.vmem [resolvable:$true] %s153
      %159 = dma.vmem_to_hbm [thread:$0]  %s154, 384, %s2, [#allocation4], 128, 128, 8
    $region17: #{tpu_custom_call.1} parent=1 // pred_fallthru
      _
    // Predicated region
    $region18: #{tpu_custom_call.1} parent=1 // pred_check
      _
    $region19: #{tpu_custom_call.1} parent=1 // pred_check_branch
      %161 = sbr.rel (0) target = $region21
    $region20: #{tpu_custom_call.1} parent=1 // pred_region
      %162 = dma.done [#allocation4], 384
    $region21: #{tpu_custom_call.1} parent=1 // pred_fallthru
      _
    %163 = vsyncpa [#allocation3], 1
    %164 = vsyncpa [#allocation4], 1

</llo_original>
